<compile_context>
chip_gen: v6e
topology: v6e:2x2x1
jax: 0.10.0
libtpu: 0.0.40
codegen_flags: <defaults>
</compile_context>

<pallas_src>
import jax
import jax.numpy as jnp
from jax.experimental import pallas as pl
from jax.experimental.pallas import tpu as pltpu


# ---------------------------------------------------------------------------
# Kernel
# ---------------------------------------------------------------------------
def _sage_leaky_relu_kernel(adj_ref, xn_ref, xs_ref, wl_ref, wr_ref, bl_ref,
                            out_ref, acc_ref):
    """One (row-tile, k-tile) step of:  leaky_relu((A@X)@Wl + b + X@Wr)."""
    k = pl.program_id(1)

    @pl.when(k == 0)
    def _():
        acc_ref[...] = jnp.zeros_like(acc_ref)

    # Accumulate the neighbor aggregation A_tile @ X_tile (bf16 in, f32 acc).
    acc_ref[...] += jnp.dot(adj_ref[...], xn_ref[...],
                            preferred_element_type=jnp.float32)

    @pl.when(k == pl.num_programs(1) - 1)
    def _():
        agg = acc_ref[...].astype(jnp.bfloat16)
        h = (jnp.dot(agg, wl_ref[...], preferred_element_type=jnp.float32)
             + jnp.dot(xs_ref[...], wr_ref[...],
                       preferred_element_type=jnp.float32)
             + bl_ref[...])
        # LeakyReLU, negative_slope = 0.01 (PyTorch default).
        out_ref[...] = jnp.where(h >= 0.0, h, 0.01 * h).astype(out_ref.dtype)


# ---------------------------------------------------------------------------
# Wrapper
# ---------------------------------------------------------------------------
def _round_up(x, m):
    return ((x + m - 1) // m) * m


def _choose_tiles(n):
    """(padded_n, tm, tk) — row tile and contraction tile, (8,128)-friendly."""
    if n <= 128:
        return 128, 128, 128
    if n <= 256:
        return 256, 256, 256
    n_pad = _round_up(n, 512)
    return n_pad, 256, 512  # adj tile 256x512 bf16 = 256 KiB -> fits v7x easily


def _pad2(a, rows, cols):
    return jnp.pad(a, ((0, rows - a.shape[0]), (0, cols - a.shape[1])))


def sage_layer(adj_bf16, x_bf16, w_l, b_l, w_r, tm, tk):
    """One fused SAGEConv + LeakyReLU layer on padded, lane-dense operands.

    adj_bf16 : (Np, Np)  bf16 row-normalized adjacency (mean aggregation)
    x_bf16   : (Np, Cin) bf16 node features (Cin a multiple of 128)
    w_l,w_r  : (Cin, Cout) bf16, b_l : (1, Cout) f32 (Cout a multiple of 128)
    """
    n_pad = adj_bf16.shape[0]
    c_in = x_bf16.shape[1]
    c_out = w_l.shape[1]
    grid = (n_pad // tm, n_pad // tk)

    flops = 2 * n_pad * n_pad * c_in + 2 * 2 * n_pad * c_in * c_out
    bytes_accessed = (adj_bf16.size * 2                    # adjacency, streamed once
                      + grid[0] * n_pad * c_in * 2         # neighbor X per row tile
                      + n_pad * c_in * 2                   # self X
                      + (w_l.size + w_r.size) * 2 + b_l.size * 4
                      + n_pad * c_out * 4)                 # output

    return pl.pallas_call(
        _sage_leaky_relu_kernel,
        out_shape=jax.ShapeDtypeStruct((n_pad, c_out), jnp.float32),
        grid_spec=pltpu.PrefetchScalarGridSpec(
            num_scalar_prefetch=0,
            grid=grid,
            in_specs=[
                pl.BlockSpec((tm, tk), lambda i, k: (i, k)),       # adj tile
                pl.BlockSpec((tk, c_in), lambda i, k: (k, 0)),     # neighbor feats
                pl.BlockSpec((tm, c_in), lambda i, k: (i, 0)),     # self feats
                pl.BlockSpec((c_in, c_out), lambda i, k: (0, 0)),  # W_l
                pl.BlockSpec((c_in, c_out), lambda i, k: (0, 0)),  # W_r
                pl.BlockSpec((1, c_out), lambda i, k: (0, 0)),     # b_l
            ],
            out_specs=pl.BlockSpec((tm, c_out), lambda i, k: (i, 0)),
            scratch_shapes=[pltpu.VMEM((tm, c_in), jnp.float32)],
        ),
        compiler_params=pltpu.CompilerParams(
            dimension_semantics=("parallel", "arbitrary"),
            vmem_limit_bytes=32 * 1024 * 1024,
        ),
        cost_estimate=pl.CostEstimate(
            flops=flops, transcendentals=0, bytes_accessed=bytes_accessed),
    )(adj_bf16, x_bf16, x_bf16, w_l, w_r, b_l)


def build_normalized_adjacency(edge_index, padded_nodes):
    """Dense row-normalized adjacency for mean aggregation (plain-JAX glue)."""
    src = edge_index[0]
    dst = edge_index[1]
    adj = jnp.zeros((padded_nodes, padded_nodes), jnp.float32)
    adj = adj.at[dst, src].add(1.0)
    deg = adj.sum(axis=1, keepdims=True)
    return adj / jnp.maximum(deg, 1.0)


def init_gnn_params(key, in_channels, hidden_channels, out_channels):
    """Deterministic synthetic parameters (shapes match PyG SAGEConv lin_l/lin_r)."""
    ks = jax.random.split(key, 6)

    def lin(k, fan_in, fan_out):
        scale = 1.0 / jnp.sqrt(jnp.float32(fan_in))
        return jax.random.uniform(k, (fan_in, fan_out), jnp.float32, -scale, scale)

    return {
        "conv1": {
            "w_l": lin(ks[0], in_channels, hidden_channels),
            "b_l": jax.random.uniform(ks[1], (1, hidden_channels), jnp.float32,
                                      -0.1, 0.1),
            "w_r": lin(ks[2], in_channels, hidden_channels),
        },
        "conv2": {
            "w_l": lin(ks[3], hidden_channels, out_channels),
            "b_l": jax.random.uniform(ks[4], (1, out_channels), jnp.float32,
                                      -0.1, 0.1),
            "w_r": lin(ks[5], hidden_channels, out_channels),
        },
    }


def gnn_forward(params, x, edge_index):
    n, c_in = x.shape
    hidden = params["conv1"]["w_l"].shape[1]
    c_out = params["conv2"]["w_l"].shape[1]

    n_pad, tm, tk = _choose_tiles(n)
    c_in_p = _round_up(c_in, 128)
    hid_p = _round_up(hidden, 128)
    c_out_p = _round_up(c_out, 128)

    # Padded, lane-dense, bf16 operands (zero-padding is semantically inert:
    # padded rows/cols are sliced off at the end).
    adj = build_normalized_adjacency(edge_index, n_pad).astype(jnp.bfloat16)
    x_p = _pad2(x, n_pad, c_in_p).astype(jnp.bfloat16)

    w_l1 = _pad2(params["conv1"]["w_l"], c_in_p, hid_p).astype(jnp.bfloat16)
    w_r1 = _pad2(params["conv1"]["w_r"], c_in_p, hid_p).astype(jnp.bfloat16)
    b_l1 = _pad2(params["conv1"]["b_l"], 1, hid_p)
    w_l2 = _pad2(params["conv2"]["w_l"], hid_p, c_out_p).astype(jnp.bfloat16)
    w_r2 = _pad2(params["conv2"]["w_r"], hid_p, c_out_p).astype(jnp.bfloat16)
    b_l2 = _pad2(params["conv2"]["b_l"], 1, c_out_p)

    h = sage_layer(adj, x_p, w_l1, b_l1, w_r1, tm, tk)          # (Np, hid_p) f32
    # dropout(p=0.1) is identity in inference mode.
    out = sage_layer(adj, h.astype(jnp.bfloat16), w_l2, b_l2, w_r2, tm, tk)
    return out[:n, :c_out]


if __name__ == "__main__":
    key = jax.random.PRNGKey(0)
    k_x, k_e_src, k_e_dst, k_p = jax.random.split(key, 4)

    num_nodes = 16
    in_channels = 8
    hidden_channels = 32
    out_channels = 16
    num_edges = 40

    x = jax.random.normal(k_x, (num_nodes, in_channels), jnp.float32)
    edge_index = jnp.stack(
        [
            jax.random.randint(k_e_src, (num_edges,), 0, num_nodes),
            jax.random.randint(k_e_dst, (num_edges,), 0, num_nodes),
        ],
        axis=0,
    ).astype(jnp.int32)

    params = init_gnn_params(k_p, in_channels, hidden_channels, out_channels)

    out = jax.jit(gnn_forward)(params, x, edge_index)
    jax.block_until_ready(out)
    assert out.shape == (num_nodes, out_channels)
    print("KERNEL_OK")
</pallas_src>

<mosaic_0001>
module attributes {stable_mosaic.version = 11 : i64} {
  func.func private @main(%arg0: i32) attributes {dimension_semantics = [#tpu.dimension_semantics<core_parallel>], iteration_bounds = array<i64: 2>, tpu.core_type = #tpu.core_type<sc_scalar_subcore>, window_params = []} {
    return
  }
}

module attributes {stable_mosaic.version = 11 : i64} {
  func.func private @main(%arg0: i32) attributes {dimension_semantics = [#tpu.dimension_semantics<core_parallel>], iteration_bounds = array<i64: 2>, tpu.core_type = #tpu.core_type<sc_scalar_subcore>, window_params = []} {
    return
  }
}

module attributes {stable_mosaic.version = 11 : i64} {
  func.func @_sage_leaky_relu_kernel(%arg0: i32, %arg1: i32, %arg2: memref<128x128xbf16, #tpu.memory_space<vmem>>, %arg3: memref<128x128xbf16, #tpu.memory_space<vmem>>, %arg4: memref<128x128xbf16, #tpu.memory_space<vmem>>, %arg5: memref<128x128xbf16, #tpu.memory_space<vmem>>, %arg6: memref<128x128xbf16, #tpu.memory_space<vmem>>, %arg7: memref<1x128xf32, #tpu.memory_space<vmem>>, %arg8: memref<128x128xf32, #tpu.memory_space<vmem>>, %arg9: memref<128x128xf32, #tpu.memory_space<vmem>>) attributes {dimension_semantics = [#tpu.dimension_semantics<parallel>, #tpu.dimension_semantics<arbitrary>], iteration_bounds = array<i64: 1, 1>, scalar_prefetch = 0 : i64, scratch_operands = 1 : i64, tpu.core_type = #tpu.core_type<tc>, window_params = [{transform_indices = @transform_0, window_bounds = array<i64: 128, 128>}, {transform_indices = @transform_1, window_bounds = array<i64: 128, 128>}, {transform_indices = @transform_2, window_bounds = array<i64: 128, 128>}, {pipeline_mode = #tpu.pipeline_mode<synchronous>, transform_indices = @transform_3, window_bounds = array<i64: 128, 128>}, {pipeline_mode = #tpu.pipeline_mode<synchronous>, transform_indices = @transform_4, window_bounds = array<i64: 128, 128>}, {pipeline_mode = #tpu.pipeline_mode<synchronous>, transform_indices = @transform_5, window_bounds = array<i64: 1, 128>}, {transform_indices = @transform_6, window_bounds = array<i64: 128, 128>}]} {
    %c0_i32 = arith.constant 0 : i32
    %0 = arith.cmpi eq, %arg1, %c0_i32 : i32
    %1 = arith.extui %0 : i1 to i32
    %c0_i32_0 = arith.constant 0 : i32
    %2 = arith.cmpi ne, %1, %c0_i32_0 : i32
    scf.if %2 {
      %cst_10 = arith.constant 0.000000e+00 : f32
      %12 = vector.broadcast %cst_10 : f32 to vector<128x128xf32>
      %c0_11 = arith.constant 0 : index
      %c0_12 = arith.constant 0 : index
      %13 = vector.load %arg9[%c0_11, %c0_12] : memref<128x128xf32, #tpu.memory_space<vmem>>, vector<128x128xf32>
      tpu.vector_store %arg9[%c0_11, %c0_12], %12 {strides = array<i32>} : memref<128x128xf32, #tpu.memory_space<vmem>>, vector<128x128xf32>,
    } else {
    }
    %c0 = arith.constant 0 : index
    %c0_1 = arith.constant 0 : index
    %3 = vector.load %arg9[%c0, %c0_1] : memref<128x128xf32, #tpu.memory_space<vmem>>, vector<128x128xf32>
    %c0_2 = arith.constant 0 : index
    %c0_3 = arith.constant 0 : index
    %4 = vector.load %arg2[%c0_2, %c0_3] : memref<128x128xbf16, #tpu.memory_space<vmem>>, vector<128x128xbf16>
    %c0_4 = arith.constant 0 : index
    %c0_5 = arith.constant 0 : index
    %5 = vector.load %arg3[%c0_4, %c0_5] : memref<128x128xbf16, #tpu.memory_space<vmem>>, vector<128x128xbf16>
    %cst = arith.constant dense<0.000000e+00> : vector<128x128xf32>
    %6 = tpu.matmul %4, %5, %cst {dimension_numbers = #tpu.dot_dimension_numbers<[1], [0], [0], [1], [0, 0, 1, 1], [], []>} : vector<128x128xbf16>, vector<128x128xbf16>, vector<128x128xf32> -> vector<128x128xf32>
    %7 = arith.addf %3, %6 : vector<128x128xf32>
    %c0_6 = arith.constant 0 : index
    %c0_7 = arith.constant 0 : index
    %8 = vector.load %arg9[%c0_6, %c0_7] : memref<128x128xf32, #tpu.memory_space<vmem>>, vector<128x128xf32>
    tpu.vector_store %arg9[%c0_6, %c0_7], %7 {strides = array<i32>} : memref<128x128xf32, #tpu.memory_space<vmem>>, vector<128x128xf32>,
    %c0_i32_8 = arith.constant 0 : i32
    %9 = arith.cmpi eq, %arg1, %c0_i32_8 : i32
    %10 = arith.extui %9 : i1 to i32
    %c0_i32_9 = arith.constant 0 : i32
    %11 = arith.cmpi ne, %10, %c0_i32_9 : i32
    scf.if %11 {
      %c0_10 = arith.constant 0 : index
      %c0_11 = arith.constant 0 : index
      %12 = vector.load %arg9[%c0_10, %c0_11] : memref<128x128xf32, #tpu.memory_space<vmem>>, vector<128x128xf32>
      %13 = arith.truncf %12 : vector<128x128xf32> to vector<128x128xbf16>
      %c0_12 = arith.constant 0 : index
      %c0_13 = arith.constant 0 : index
      %14 = vector.load %arg5[%c0_12, %c0_13] : memref<128x128xbf16, #tpu.memory_space<vmem>>, vector<128x128xbf16>
      %cst_14 = arith.constant dense<0.000000e+00> : vector<128x128xf32>
      %15 = tpu.matmul %13, %14, %cst_14 {dimension_numbers = #tpu.dot_dimension_numbers<[1], [0], [0], [1], [0, 0, 1, 1], [], []>} : vector<128x128xbf16>, vector<128x128xbf16>, vector<128x128xf32> -> vector<128x128xf32>
      %c0_15 = arith.constant 0 : index
      %c0_16 = arith.constant 0 : index
      %16 = vector.load %arg4[%c0_15, %c0_16] : memref<128x128xbf16, #tpu.memory_space<vmem>>, vector<128x128xbf16>
      %c0_17 = arith.constant 0 : index
      %c0_18 = arith.constant 0 : index
      %17 = vector.load %arg6[%c0_17, %c0_18] : memref<128x128xbf16, #tpu.memory_space<vmem>>, vector<128x128xbf16>
      %cst_19 = arith.constant dense<0.000000e+00> : vector<128x128xf32>
      %18 = tpu.matmul %16, %17, %cst_19 {dimension_numbers = #tpu.dot_dimension_numbers<[1], [0], [0], [1], [0, 0, 1, 1], [], []>} : vector<128x128xbf16>, vector<128x128xbf16>, vector<128x128xf32> -> vector<128x128xf32>
      %19 = arith.addf %15, %18 : vector<128x128xf32>
      %c0_20 = arith.constant 0 : index
      %c0_21 = arith.constant 0 : index
      %20 = vector.load %arg7[%c0_20, %c0_21] : memref<1x128xf32, #tpu.memory_space<vmem>>, vector<1x128xf32>
      %21 = vector.broadcast %20 : vector<1x128xf32> to vector<128x128xf32>
      %22 = arith.addf %19, %21 : vector<128x128xf32>
      %cst_22 = arith.constant 0.000000e+00 : f32
      %23 = vector.broadcast %cst_22 : f32 to vector<128x128xf32>
      %24 = arith.cmpf oge, %22, %23 : vector<128x128xf32>
      %cst_23 = arith.constant 0.00999999977 : f32
      %25 = vector.broadcast %cst_23 : f32 to vector<128x128xf32>
      %26 = arith.mulf %25, %22 : vector<128x128xf32>
      %27 = arith.select %24, %22, %26 : vector<128x128xi1>, vector<128x128xf32>
      %c0_24 = arith.constant 0 : index
      %c0_25 = arith.constant 0 : index
      %28 = vector.load %arg8[%c0_24, %c0_25] : memref<128x128xf32, #tpu.memory_space<vmem>>, vector<128x128xf32>
      tpu.vector_store %arg8[%c0_24, %c0_25], %27 {strides = array<i32>} : memref<128x128xf32, #tpu.memory_space<vmem>>, vector<128x128xf32>,
    } else {
    }
    return
  }
  func.func @transform_0(%arg0: i32, %arg1: i32) -> (i32, i32) {
    %c0_i32 = arith.constant 0 : i32
    return %arg0, %arg1 : i32, i32
  }
  func.func @transform_1(%arg0: i32, %arg1: i32) -> (i32, i32) {
    %c0_i32 = arith.constant 0 : i32
    %c0_i32_0 = arith.constant 0 : i32
    return %arg1, %c0_i32 : i32, i32
  }
  func.func @transform_2(%arg0: i32, %arg1: i32) -> (i32, i32) {
    %c0_i32 = arith.constant 0 : i32
    %c0_i32_0 = arith.constant 0 : i32
    return %arg0, %c0_i32 : i32, i32
  }
  func.func @transform_3(%arg0: i32, %arg1: i32) -> (i32, i32) {
    %c0_i32 = arith.constant 0 : i32
    %c0_i32_0 = arith.constant 0 : i32
    %c0_i32_1 = arith.constant 0 : i32
    return %c0_i32, %c0_i32_0 : i32, i32
  }
  func.func @transform_4(%arg0: i32, %arg1: i32) -> (i32, i32) {
    %c0_i32 = arith.constant 0 : i32
    %c0_i32_0 = arith.constant 0 : i32
    %c0_i32_1 = arith.constant 0 : i32
    return %c0_i32, %c0_i32_0 : i32, i32
  }
  func.func @transform_5(%arg0: i32, %arg1: i32) -> (i32, i32) {
    %c0_i32 = arith.constant 0 : i32
    %c0_i32_0 = arith.constant 0 : i32
    %c0_i32_1 = arith.constant 0 : i32
    return %c0_i32, %c0_i32_0 : i32, i32
  }
  func.func @transform_6(%arg0: i32, %arg1: i32) -> (i32, i32) {
    %c0_i32 = arith.constant 0 : i32
    %c0_i32_0 = arith.constant 0 : i32
    return %arg0, %c0_i32 : i32, i32
  }
}

</mosaic_0001>

<llo_original>
// kernel: gnn_forward.2
$region0: #{gnn_forward.2}
  #allocation0 [shape = 'u32[]', space=smem, size = 0x4, offset = 0x4, fixed_abs, tag = 'smem constant byte address 0x4 - core index']
  #allocation1 [shape = 'u32[144,128]{1,0:T(1,128)}', space=vmem, size = 0x12000, scoped, tag = 'internal scratch']
  #allocation2 [shape = 'f32[128,128]{1,0:T(8,128)}', space=vmem, size = 0x10000, scoped, tag = 'scratch operand']
  %s0 = inlined_call_operand.vmem [shape: bf16[128,128], index: 0, kind: input, shape index: {}]
  %s1 = inlined_call_operand.vmem [shape: bf16[128,128], index: 1, kind: input, shape index: {}, may-alias: {1,2}]
  %s2 = inlined_call_operand.vmem [shape: bf16[128,128], index: 2, kind: input, shape index: {}, may-alias: {1,2}]
  %s3 = inlined_call_operand.vmem [shape: bf16[128,128], index: 3, kind: input, shape index: {}]
  %s4 = inlined_call_operand.vmem [shape: bf16[128,128], index: 4, kind: input, shape index: {}]
  %s5 = inlined_call_operand.vmem [shape: f32[1,128], index: 5, kind: input, shape index: {}]
  %s6 = inlined_call_operand.vmem [shape: f32[128,128], index: 6, kind: output, shape index: {}]
  %s7 = sld [smem:[#allocation0]]
  $region42: #{gnn_forward.2} parent=0
    _
  %s9 = ssub.s32 1, %s7
  %s10 = scalar_select 0, %s9, %s7
  // Predicated region
  $region2: #{gnn_forward.2} parent=0 // pred_check
    _
  $region3: #{gnn_forward.2} parent=0 // pred_check_branch
    %12 = sbr.rel (0) target = $region5
  $region4: #{gnn_forward.2} parent=0 // pred_region
    _
  $region5: #{gnn_forward.2} parent=0 // pred_fallthru
    _
  // Predicated region
  $region6: #{gnn_forward.2} parent=0 // pred_check
    _
  $region7: #{gnn_forward.2} parent=0 // pred_check_branch
    %14 = sbr.rel (0) target = $region9
  $region8: #{gnn_forward.2} parent=0 // pred_region
    _
  $region9: #{gnn_forward.2} parent=0 // pred_fallthru
    _
  // Predicated region
  $region10: #{gnn_forward.2} parent=0 // pred_check
    _
  $region11: #{gnn_forward.2} parent=0 // pred_check_branch
    %16 = sbr.rel (0) target = $region13
  $region12: #{gnn_forward.2} parent=0 // pred_region
    _
  $region13: #{gnn_forward.2} parent=0 // pred_fallthru
    _
  // Predicated region
  $region14: #{gnn_forward.2} parent=0 // pred_check
    _
  $region15: #{gnn_forward.2} parent=0 // pred_check_branch
    %18 = sbr.rel (0) target = $region17
  $region16: #{gnn_forward.2} parent=0 // pred_region
    _
  $region17: #{gnn_forward.2} parent=0 // pred_fallthru
    _
  // Predicated region
  $region18: #{gnn_forward.2} parent=0 // pred_check
    _
  $region19: #{gnn_forward.2} parent=0 // pred_check_branch
    %20 = sbr.rel (0) target = $region21
  $region20: #{gnn_forward.2} parent=0 // pred_region
    _
  $region21: #{gnn_forward.2} parent=0 // pred_fallthru
    _
  // Predicated region
  $region22: #{gnn_forward.2} parent=0 // pred_check
    _
  $region23: #{gnn_forward.2} parent=0 // pred_check_branch
    %22 = sbr.rel (0) target = $region25
  $region24: #{gnn_forward.2} parent=0 // pred_region
    _
  $region25: #{gnn_forward.2} parent=0 // pred_fallthru
    _
  %p24 = scmp.eq.s32.totalorder 0, 0
  // Predicated region
  $region26: #{gnn_forward.2} parent=0 // pred_check
    %p25 = pneg %p24
  $region27: #{gnn_forward.2} parent=0 // pred_check_branch
    %27 = sbr.rel (%p25) target = $region29
  $region28: #{gnn_forward.2} parent=0 // pred_region
    %28 = vst [vmem:[#allocation2] sm:$0xff] 0.0
    %29 = vst [vmem:[#allocation2 + $0x8] sm:$0xff] 0.0
    %30 = vst [vmem:[#allocation2 + $0x10] sm:$0xff] 0.0
    %31 = vst [vmem:[#allocation2 + $0x18] sm:$0xff] 0.0
    %32 = vst [vmem:[#allocation2 + $0x20] sm:$0xff] 0.0
    %33 = vst [vmem:[#allocation2 + $0x28] sm:$0xff] 0.0
    %34 = vst [vmem:[#allocation2 + $0x30] sm:$0xff] 0.0
    %35 = vst [vmem:[#allocation2 + $0x38] sm:$0xff] 0.0
    %36 = vst [vmem:[#allocation2 + $0x40] sm:$0xff] 0.0
    %37 = vst [vmem:[#allocation2 + $0x48] sm:$0xff] 0.0
    %38 = vst [vmem:[#allocation2 + $0x50] sm:$0xff] 0.0
    %39 = vst [vmem:[#allocation2 + $0x58] sm:$0xff] 0.0
    %40 = vst [vmem:[#allocation2 + $0x60] sm:$0xff] 0.0
    %41 = vst [vmem:[#allocation2 + $0x68] sm:$0xff] 0.0
    %42 = vst [vmem:[#allocation2 + $0x70] sm:$0xff] 0.0
    %43 = vst [vmem:[#allocation2 + $0x78] sm:$0xff] 0.0
  $region29: #{gnn_forward.2} parent=0 // pred_fallthru
    _
  %v44 = vld [vmem:[#allocation2] sm:$0xff]
  %v45 = vld [vmem:[#allocation2 + $0x8] sm:$0xff]
  %v46 = vld [vmem:[#allocation2 + $0x10] sm:$0xff]
  %v47 = vld [vmem:[#allocation2 + $0x18] sm:$0xff]
  %v48 = vld [vmem:[#allocation2 + $0x20] sm:$0xff]
  %v49 = vld [vmem:[#allocation2 + $0x28] sm:$0xff]
  %v50 = vld [vmem:[#allocation2 + $0x30] sm:$0xff]
  %v51 = vld [vmem:[#allocation2 + $0x38] sm:$0xff]
  %v52 = vld [vmem:[#allocation2 + $0x40] sm:$0xff]
  %v53 = vld [vmem:[#allocation2 + $0x48] sm:$0xff]
  %v54 = vld [vmem:[#allocation2 + $0x50] sm:$0xff]
  %v55 = vld [vmem:[#allocation2 + $0x58] sm:$0xff]
  %v56 = vld [vmem:[#allocation2 + $0x60] sm:$0xff]
  %v57 = vld [vmem:[#allocation2 + $0x68] sm:$0xff]
  %v58 = vld [vmem:[#allocation2 + $0x70] sm:$0xff]
  %v59 = vld [vmem:[#allocation2 + $0x78] sm:$0xff]
  %v60 = vld [vmem:[%s0] sm:$0xf]
  %v61 = vld [vmem:[%s0 + $0x4] sm:$0xf]
  %v62 = vld [vmem:[%s0 + $0x8] sm:$0xf]
  %v63 = vld [vmem:[%s0 + $0xc] sm:$0xf]
  %v64 = vld [vmem:[%s0 + $0x10] sm:$0xf]
  %v65 = vld [vmem:[%s0 + $0x14] sm:$0xf]
  %v66 = vld [vmem:[%s0 + $0x18] sm:$0xf]
  %v67 = vld [vmem:[%s0 + $0x1c] sm:$0xf]
  %v68 = vld [vmem:[%s0 + $0x20] sm:$0xf]
  %v69 = vld [vmem:[%s0 + $0x24] sm:$0xf]
  %v70 = vld [vmem:[%s0 + $0x28] sm:$0xf]
  %v71 = vld [vmem:[%s0 + $0x2c] sm:$0xf]
  %v72 = vld [vmem:[%s0 + $0x30] sm:$0xf]
  %v73 = vld [vmem:[%s0 + $0x34] sm:$0xf]
  %v74 = vld [vmem:[%s0 + $0x38] sm:$0xf]
  %v75 = vld [vmem:[%s0 + $0x3c] sm:$0xf]
  %v76 = vld [vmem:[%s1] sm:$0xf]
  %v77 = vld [vmem:[%s1 + $0x4] sm:$0xf]
  %v78 = vld [vmem:[%s1 + $0x8] sm:$0xf]
  %v79 = vld [vmem:[%s1 + $0xc] sm:$0xf]
  %v80 = vld [vmem:[%s1 + $0x10] sm:$0xf]
  %v81 = vld [vmem:[%s1 + $0x14] sm:$0xf]
  %v82 = vld [vmem:[%s1 + $0x18] sm:$0xf]
  %v83 = vld [vmem:[%s1 + $0x1c] sm:$0xf]
  %v84 = vld [vmem:[%s1 + $0x20] sm:$0xf]
  %v85 = vld [vmem:[%s1 + $0x24] sm:$0xf]
  %v86 = vld [vmem:[%s1 + $0x28] sm:$0xf]
  %v87 = vld [vmem:[%s1 + $0x2c] sm:$0xf]
  %v88 = vld [vmem:[%s1 + $0x30] sm:$0xf]
  %v89 = vld [vmem:[%s1 + $0x34] sm:$0xf]
  %v90 = vld [vmem:[%s1 + $0x38] sm:$0xf]
  %v91 = vld [vmem:[%s1 + $0x3c] sm:$0xf]
  %v108 = vunpack.c.l.b16 %v60
  %v109 = vunpack.c.l.b16 %v61
  %v110 = vunpack.c.l.b16 %v62
  %v111 = vunpack.c.l.b16 %v63
  %v112 = vunpack.c.l.b16 %v64
  %v113 = vunpack.c.l.b16 %v65
  %v114 = vunpack.c.l.b16 %v66
  %v115 = vunpack.c.l.b16 %v67
  %v116 = vunpack.c.l.b16 %v68
  %v117 = vunpack.c.l.b16 %v69
  %v118 = vunpack.c.l.b16 %v70
  %v119 = vunpack.c.l.b16 %v71
  %v120 = vunpack.c.l.b16 %v72
  %v121 = vunpack.c.l.b16 %v73
  %v122 = vunpack.c.l.b16 %v74
  %v123 = vunpack.c.l.b16 %v75
  %v124 = vpack.c.b16 %v109, %v108
  %v125 = vpack.c.b16 %v111, %v110
  %v126 = vpack.c.b16 %v113, %v112
  %v127 = vpack.c.b16 %v115, %v114
  %v128 = vpack.c.b16 %v117, %v116
  %v129 = vpack.c.b16 %v119, %v118
  %v130 = vpack.c.b16 %v121, %v120
  %v131 = vpack.c.b16 %v123, %v122
  %v156 = vunpack.c.l.b16 %v76
  %v157 = vunpack.c.l.b16 %v77
  %v158 = vunpack.c.l.b16 %v78
  %v159 = vunpack.c.l.b16 %v79
  %v160 = vunpack.c.l.b16 %v80
  %v161 = vunpack.c.l.b16 %v81
  %v162 = vunpack.c.l.b16 %v82
  %v163 = vunpack.c.l.b16 %v83
  %v164 = vunpack.c.l.b16 %v84
  %v165 = vunpack.c.l.b16 %v85
  %v166 = vunpack.c.l.b16 %v86
  %v167 = vunpack.c.l.b16 %v87
  %v168 = vunpack.c.l.b16 %v88
  %v169 = vunpack.c.l.b16 %v89
  %v170 = vunpack.c.l.b16 %v90
  %v171 = vunpack.c.l.b16 %v91
  %v172 = vpack.c.b16 %v157, %v156
  %v173 = vpack.c.b16 %v159, %v158
  %v174 = vpack.c.b16 %v161, %v160
  %v175 = vpack.c.b16 %v163, %v162
  %v176 = vpack.c.b16 %v165, %v164
  %v177 = vpack.c.b16 %v167, %v166
  %v178 = vpack.c.b16 %v169, %v168
  %v179 = vpack.c.b16 %v171, %v170
  %188 = vmatprep.subr.bf16.mxu0 0
  %189 = vmatpush1.bf16.msra.mxu0 %v179
  %190 = vmatprep.subr.bf16.mxu0 0
  %191 = vmatpush1.bf16.msra.mxu0 %v178
  %192 = vmatprep.subr.bf16.mxu0 0
  %193 = vmatpush1.bf16.msra.mxu0 %v177
  %194 = vmatprep.subr.bf16.mxu0 0
  %195 = vmatpush1.bf16.msra.mxu0 %v176
  %196 = vmatprep.subr.bf16.mxu0 0
  %197 = vmatpush1.bf16.msra.mxu0 %v175
  %198 = vmatprep.subr.bf16.mxu0 0
  %199 = vmatpush1.bf16.msra.mxu0 %v174
  %200 = vmatprep.subr.bf16.mxu0 0
  %201 = vmatpush1.bf16.msra.mxu0 %v173
  %202 = vmatprep.subr.bf16.mxu0 0
  %203 = vmatpush1.bf16.msra.mxu0 %v172
  %204 = vmatprep.subr.bf16.mxu0 0
  %205 = vmatpush2.bf16.msra.mxu0 0
  %206 = vmatprep.subr.bf16.mxu0 0
  %207 = vmatpush2.bf16.msra.mxu0 0
  %208 = vmatprep.subr.bf16.mxu0 0
  %209 = vmatpush2.bf16.msra.mxu0 0
  %210 = vmatprep.subr.bf16.mxu0 0
  %211 = vmatpush2.bf16.msra.mxu0 0
  %212 = vmatprep.subr.bf16.mxu0 0
  %213 = vmatpush2.bf16.msra.mxu0 0
  %214 = vmatprep.subr.bf16.mxu0 0
  %215 = vmatpush2.bf16.msra.mxu0 0
  %216 = vmatprep.subr.bf16.mxu0 0
  %217 = vmatpush2.bf16.msra.mxu0 0
  %218 = vmatprep.subr.bf16.mxu0 0
  %219 = vmatpush2.bf16.msra.mxu0 0
  %220 = vmatprep.mubr.bf16.mxu0 0
  %221 = vmatmul.mubr.bf16.gmra.mxu0 %v124
  %v222 = vpop.f32.mrf.mxu0
  %v223 = vadd.f32 0.0, %v222
  %v224 = vpop.f32.mrf.mxu0
  %v225 = vpop.f32.mrf.mxu0
  %v226 = vadd.f32 0.0, %v225
  %v227 = vpop.f32.mrf.mxu0
  %228 = vmatprep.mubr.bf16.mxu0 0
  %229 = vmatmul.mubr.bf16.gmra.mxu0 %v125
  %v230 = vpop.f32.mrf.mxu0
  %v231 = vadd.f32 0.0, %v230
  %v232 = vpop.f32.mrf.mxu0
  %v233 = vpop.f32.mrf.mxu0
  %v234 = vadd.f32 0.0, %v233
  %v235 = vpop.f32.mrf.mxu0
  %236 = vmatprep.mubr.bf16.mxu0 0
  %237 = vmatmul.mubr.bf16.gmra.mxu0 %v126
  %v238 = vpop.f32.mrf.mxu0
  %v239 = vadd.f32 0.0, %v238
  %v240 = vpop.f32.mrf.mxu0
  %v241 = vpop.f32.mrf.mxu0
  %v242 = vadd.f32 0.0, %v241
  %v243 = vpop.f32.mrf.mxu0
  %244 = vmatprep.mubr.bf16.mxu0 0
  %245 = vmatmul.mubr.bf16.gmra.mxu0 %v127
  %v246 = vpop.f32.mrf.mxu0
  %v247 = vadd.f32 0.0, %v246
  %v248 = vpop.f32.mrf.mxu0
  %v249 = vpop.f32.mrf.mxu0
  %v250 = vadd.f32 0.0, %v249
  %v251 = vpop.f32.mrf.mxu0
  %252 = vmatprep.mubr.bf16.mxu0 0
  %253 = vmatmul.mubr.bf16.gmra.mxu0 %v128
  %v254 = vpop.f32.mrf.mxu0
  %v255 = vadd.f32 0.0, %v254
  %v256 = vpop.f32.mrf.mxu0
  %v257 = vpop.f32.mrf.mxu0
  %v258 = vadd.f32 0.0, %v257
  %v259 = vpop.f32.mrf.mxu0
  %260 = vmatprep.mubr.bf16.mxu0 0
  %261 = vmatmul.mubr.bf16.gmra.mxu0 %v129
  %v262 = vpop.f32.mrf.mxu0
  %v263 = vadd.f32 0.0, %v262
  %v264 = vpop.f32.mrf.mxu0
  %v265 = vpop.f32.mrf.mxu0
  %v266 = vadd.f32 0.0, %v265
  %v267 = vpop.f32.mrf.mxu0
  %268 = vmatprep.mubr.bf16.mxu0 0
  %269 = vmatmul.mubr.bf16.gmra.mxu0 %v130
  %v270 = vpop.f32.mrf.mxu0
  %v271 = vadd.f32 0.0, %v270
  %v272 = vpop.f32.mrf.mxu0
  %v273 = vpop.f32.mrf.mxu0
  %v274 = vadd.f32 0.0, %v273
  %v275 = vpop.f32.mrf.mxu0
  %276 = vmatprep.mubr.bf16.mxu0 0
  %277 = vmatmul.mubr.bf16.gmra.mxu0 %v131
  %v278 = vpop.f32.mrf.mxu0
  %v279 = vadd.f32 0.0, %v278
  %v280 = vpop.f32.mrf.mxu0
  %v281 = vpop.f32.mrf.mxu0
  %v282 = vadd.f32 0.0, %v281
  %v283 = vpop.f32.mrf.mxu0
  %284 = vdwg.mxu0
  %v285 = vadd.f32 %v44, %v223
  %v286 = vadd.f32 %v45, %v226
  %v287 = vadd.f32 %v46, %v231
  %v288 = vadd.f32 %v47, %v234
  %v289 = vadd.f32 %v48, %v239
  %v290 = vadd.f32 %v49, %v242
  %v291 = vadd.f32 %v50, %v247
  %v292 = vadd.f32 %v51, %v250
  %v293 = vadd.f32 %v52, %v255
  %v294 = vadd.f32 %v53, %v258
  %v295 = vadd.f32 %v54, %v263
  %v296 = vadd.f32 %v55, %v266
  %v297 = vadd.f32 %v56, %v271
  %v298 = vadd.f32 %v57, %v274
  %v299 = vadd.f32 %v58, %v279
  %v300 = vadd.f32 %v59, %v282
  %301 = vst [vmem:[#allocation2] sm:$0xff] %v285
  %302 = vst [vmem:[#allocation2 + $0x8] sm:$0xff] %v286
  %303 = vst [vmem:[#allocation2 + $0x10] sm:$0xff] %v287
  %304 = vst [vmem:[#allocation2 + $0x18] sm:$0xff] %v288
  %305 = vst [vmem:[#allocation2 + $0x20] sm:$0xff] %v289
  %306 = vst [vmem:[#allocation2 + $0x28] sm:$0xff] %v290
  %307 = vst [vmem:[#allocation2 + $0x30] sm:$0xff] %v291
  %308 = vst [vmem:[#allocation2 + $0x38] sm:$0xff] %v292
  %309 = vst [vmem:[#allocation2 + $0x40] sm:$0xff] %v293
  %310 = vst [vmem:[#allocation2 + $0x48] sm:$0xff] %v294
  %311 = vst [vmem:[#allocation2 + $0x50] sm:$0xff] %v295
  %312 = vst [vmem:[#allocation2 + $0x58] sm:$0xff] %v296
  %313 = vst [vmem:[#allocation2 + $0x60] sm:$0xff] %v297
  %314 = vst [vmem:[#allocation2 + $0x68] sm:$0xff] %v298
  %315 = vst [vmem:[#allocation2 + $0x70] sm:$0xff] %v299
  %316 = vst [vmem:[#allocation2 + $0x78] sm:$0xff] %v300
  // Predicated region
  $region30: #{gnn_forward.2} parent=0 // pred_check
    %p317 = pneg %p24
  $region31: #{gnn_forward.2} parent=0 // pred_check_branch
    %319 = sbr.rel (%p317) target = $region33
  $region32: #{gnn_forward.2} parent=0 // pred_region
    %v320 = vld [vmem:[#allocation2] sm:$0xff]
    %v321 = vld [vmem:[#allocation2 + $0x8] sm:$0xff]
    %v322 = vld [vmem:[#allocation2 + $0x10] sm:$0xff]
    %v323 = vld [vmem:[#allocation2 + $0x18] sm:$0xff]
    %v324 = vld [vmem:[#allocation2 + $0x20] sm:$0xff]
    %v325 = vld [vmem:[#allocation2 + $0x28] sm:$0xff]
    %v326 = vld [vmem:[#allocation2 + $0x30] sm:$0xff]
    %v327 = vld [vmem:[#allocation2 + $0x38] sm:$0xff]
    %v328 = vld [vmem:[#allocation2 + $0x40] sm:$0xff]
    %v329 = vld [vmem:[#allocation2 + $0x48] sm:$0xff]
    %v330 = vld [vmem:[#allocation2 + $0x50] sm:$0xff]
    %v331 = vld [vmem:[#allocation2 + $0x58] sm:$0xff]
    %v332 = vld [vmem:[#allocation2 + $0x60] sm:$0xff]
    %v333 = vld [vmem:[#allocation2 + $0x68] sm:$0xff]
    %v334 = vld [vmem:[#allocation2 + $0x70] sm:$0xff]
    %v335 = vld [vmem:[#allocation2 + $0x78] sm:$0xff]
    %v336 = vpack.c.bf16 %v321, %v320
    %v337 = vpack.c.bf16 %v323, %v322
    %v338 = vpack.c.bf16 %v325, %v324
    %v339 = vpack.c.bf16 %v327, %v326
    %v340 = vpack.c.bf16 %v329, %v328
    %v341 = vpack.c.bf16 %v331, %v330
    %v342 = vpack.c.bf16 %v333, %v332
    %v343 = vpack.c.bf16 %v335, %v334
    %v344 = vld [vmem:[%s3] sm:$0xf]
    %v345 = vld [vmem:[%s3 + $0x4] sm:$0xf]
    %v346 = vld [vmem:[%s3 + $0x8] sm:$0xf]
    %v347 = vld [vmem:[%s3 + $0xc] sm:$0xf]
    %v348 = vld [vmem:[%s3 + $0x10] sm:$0xf]
    %v349 = vld [vmem:[%s3 + $0x14] sm:$0xf]
    %v350 = vld [vmem:[%s3 + $0x18] sm:$0xf]
    %v351 = vld [vmem:[%s3 + $0x1c] sm:$0xf]
    %v352 = vld [vmem:[%s3 + $0x20] sm:$0xf]
    %v353 = vld [vmem:[%s3 + $0x24] sm:$0xf]
    %v354 = vld [vmem:[%s3 + $0x28] sm:$0xf]
    %v355 = vld [vmem:[%s3 + $0x2c] sm:$0xf]
    %v356 = vld [vmem:[%s3 + $0x30] sm:$0xf]
    %v357 = vld [vmem:[%s3 + $0x34] sm:$0xf]
    %v358 = vld [vmem:[%s3 + $0x38] sm:$0xf]
    %v359 = vld [vmem:[%s3 + $0x3c] sm:$0xf]
    %v360 = vld [vmem:[%s2] sm:$0xf]
    %v361 = vld [vmem:[%s2 + $0x4] sm:$0xf]
    %v362 = vld [vmem:[%s2 + $0x8] sm:$0xf]
    %v363 = vld [vmem:[%s2 + $0xc] sm:$0xf]
    %v364 = vld [vmem:[%s2 + $0x10] sm:$0xf]
    %v365 = vld [vmem:[%s2 + $0x14] sm:$0xf]
    %v366 = vld [vmem:[%s2 + $0x18] sm:$0xf]
    %v367 = vld [vmem:[%s2 + $0x1c] sm:$0xf]
    %v368 = vld [vmem:[%s2 + $0x20] sm:$0xf]
    %v369 = vld [vmem:[%s2 + $0x24] sm:$0xf]
    %v370 = vld [vmem:[%s2 + $0x28] sm:$0xf]
    %v371 = vld [vmem:[%s2 + $0x2c] sm:$0xf]
    %v372 = vld [vmem:[%s2 + $0x30] sm:$0xf]
    %v373 = vld [vmem:[%s2 + $0x34] sm:$0xf]
    %v374 = vld [vmem:[%s2 + $0x38] sm:$0xf]
    %v375 = vld [vmem:[%s2 + $0x3c] sm:$0xf]
    %v376 = vld [vmem:[%s4] sm:$0xf]
    %v377 = vld [vmem:[%s4 + $0x4] sm:$0xf]
    %v378 = vld [vmem:[%s4 + $0x8] sm:$0xf]
    %v379 = vld [vmem:[%s4 + $0xc] sm:$0xf]
    %v380 = vld [vmem:[%s4 + $0x10] sm:$0xf]
    %v381 = vld [vmem:[%s4 + $0x14] sm:$0xf]
    %v382 = vld [vmem:[%s4 + $0x18] sm:$0xf]
    %v383 = vld [vmem:[%s4 + $0x1c] sm:$0xf]
    %v384 = vld [vmem:[%s4 + $0x20] sm:$0xf]
    %v385 = vld [vmem:[%s4 + $0x24] sm:$0xf]
    %v386 = vld [vmem:[%s4 + $0x28] sm:$0xf]
    %v387 = vld [vmem:[%s4 + $0x2c] sm:$0xf]
    %v388 = vld [vmem:[%s4 + $0x30] sm:$0xf]
    %v389 = vld [vmem:[%s4 + $0x34] sm:$0xf]
    %v390 = vld [vmem:[%s4 + $0x38] sm:$0xf]
    %v391 = vld [vmem:[%s4 + $0x3c] sm:$0xf]
    %v408 = vunpack.c.l.b16 %v360
    %v409 = vunpack.c.l.b16 %v361
    %v410 = vunpack.c.l.b16 %v362
    %v411 = vunpack.c.l.b16 %v363
    %v412 = vunpack.c.l.b16 %v364
    %v413 = vunpack.c.l.b16 %v365
    %v414 = vunpack.c.l.b16 %v366
    %v415 = vunpack.c.l.b16 %v367
    %v416 = vunpack.c.l.b16 %v368
    %v417 = vunpack.c.l.b16 %v369
    %v418 = vunpack.c.l.b16 %v370
    %v419 = vunpack.c.l.b16 %v371
    %v420 = vunpack.c.l.b16 %v372
    %v421 = vunpack.c.l.b16 %v373
    %v422 = vunpack.c.l.b16 %v374
    %v423 = vunpack.c.l.b16 %v375
    %v424 = vpack.c.b16 %v409, %v408
    %v425 = vpack.c.b16 %v411, %v410
    %v426 = vpack.c.b16 %v413, %v412
    %v427 = vpack.c.b16 %v415, %v414
    %v428 = vpack.c.b16 %v417, %v416
    %v429 = vpack.c.b16 %v419, %v418
    %v430 = vpack.c.b16 %v421, %v420
    %v431 = vpack.c.b16 %v423, %v422
    %v456 = vunpack.c.l.b16 %v376
    %v457 = vunpack.c.l.b16 %v377
    %v458 = vunpack.c.l.b16 %v378
    %v459 = vunpack.c.l.b16 %v379
    %v460 = vunpack.c.l.b16 %v380
    %v461 = vunpack.c.l.b16 %v381
    %v462 = vunpack.c.l.b16 %v382
    %v463 = vunpack.c.l.b16 %v383
    %v464 = vunpack.c.l.b16 %v384
    %v465 = vunpack.c.l.b16 %v385
    %v466 = vunpack.c.l.b16 %v386
    %v467 = vunpack.c.l.b16 %v387
    %v468 = vunpack.c.l.b16 %v388
    %v469 = vunpack.c.l.b16 %v389
    %v470 = vunpack.c.l.b16 %v390
    %v471 = vunpack.c.l.b16 %v391
    %v472 = vpack.c.b16 %v457, %v456
    %v473 = vpack.c.b16 %v459, %v458
    %v474 = vpack.c.b16 %v461, %v460
    %v475 = vpack.c.b16 %v463, %v462
    %v476 = vpack.c.b16 %v465, %v464
    %v477 = vpack.c.b16 %v467, %v466
    %v478 = vpack.c.b16 %v469, %v468
    %v479 = vpack.c.b16 %v471, %v470
    %488 = vmatprep.subr.bf16.mxu0 0
    %489 = vmatpush1.bf16.msra.mxu0 %v479
    %490 = vmatprep.subr.bf16.mxu0 0
    %491 = vmatpush1.bf16.msra.mxu0 %v478
    %492 = vmatprep.subr.bf16.mxu0 0
    %493 = vmatpush1.bf16.msra.mxu0 %v477
    %494 = vmatprep.subr.bf16.mxu0 0
    %495 = vmatpush1.bf16.msra.mxu0 %v476
    %496 = vmatprep.subr.bf16.mxu0 0
    %497 = vmatpush1.bf16.msra.mxu0 %v475
    %498 = vmatprep.subr.bf16.mxu0 0
    %499 = vmatpush1.bf16.msra.mxu0 %v474
    %500 = vmatprep.subr.bf16.mxu0 0
    %501 = vmatpush1.bf16.msra.mxu0 %v473
    %502 = vmatprep.subr.bf16.mxu0 0
    %503 = vmatpush1.bf16.msra.mxu0 %v472
    %504 = vmatprep.subr.bf16.mxu0 0
    %505 = vmatpush2.bf16.msra.mxu0 0
    %506 = vmatprep.subr.bf16.mxu0 0
    %507 = vmatpush2.bf16.msra.mxu0 0
    %508 = vmatprep.subr.bf16.mxu0 0
    %509 = vmatpush2.bf16.msra.mxu0 0
    %510 = vmatprep.subr.bf16.mxu0 0
    %511 = vmatpush2.bf16.msra.mxu0 0
    %512 = vmatprep.subr.bf16.mxu0 0
    %513 = vmatpush2.bf16.msra.mxu0 0
    %514 = vmatprep.subr.bf16.mxu0 0
    %515 = vmatpush2.bf16.msra.mxu0 0
    %516 = vmatprep.subr.bf16.mxu0 0
    %517 = vmatpush2.bf16.msra.mxu0 0
    %518 = vmatprep.subr.bf16.mxu0 0
    %519 = vmatpush2.bf16.msra.mxu0 0
    %520 = vmatprep.mubr.bf16.mxu0 0
    %521 = vmatmul.mubr.bf16.gmra.mxu0 %v424
    %v522 = vpop.f32.mrf.mxu0
    %v523 = vadd.f32 0.0, %v522
    %v524 = vpop.f32.mrf.mxu0
    %v525 = vpop.f32.mrf.mxu0
    %v526 = vadd.f32 0.0, %v525
    %v527 = vpop.f32.mrf.mxu0
    %528 = vmatprep.mubr.bf16.mxu0 0
    %529 = vmatmul.mubr.bf16.gmra.mxu0 %v425
    %v530 = vpop.f32.mrf.mxu0
    %v531 = vadd.f32 0.0, %v530
    %v532 = vpop.f32.mrf.mxu0
    %v533 = vpop.f32.mrf.mxu0
    %v534 = vadd.f32 0.0, %v533
    %v535 = vpop.f32.mrf.mxu0
    %536 = vmatprep.mubr.bf16.mxu0 0
    %537 = vmatmul.mubr.bf16.gmra.mxu0 %v426
    %v538 = vpop.f32.mrf.mxu0
    %v539 = vadd.f32 0.0, %v538
    %v540 = vpop.f32.mrf.mxu0
    %v541 = vpop.f32.mrf.mxu0
    %v542 = vadd.f32 0.0, %v541
    %v543 = vpop.f32.mrf.mxu0
    %544 = vmatprep.mubr.bf16.mxu0 0
    %545 = vmatmul.mubr.bf16.gmra.mxu0 %v427
    %v546 = vpop.f32.mrf.mxu0
    %v547 = vadd.f32 0.0, %v546
    %v548 = vpop.f32.mrf.mxu0
    %v549 = vpop.f32.mrf.mxu0
    %v550 = vadd.f32 0.0, %v549
    %v551 = vpop.f32.mrf.mxu0
    %552 = vmatprep.mubr.bf16.mxu0 0
    %553 = vmatmul.mubr.bf16.gmra.mxu0 %v428
    %v554 = vpop.f32.mrf.mxu0
    %v555 = vadd.f32 0.0, %v554
    %v556 = vpop.f32.mrf.mxu0
    %v557 = vpop.f32.mrf.mxu0
    %v558 = vadd.f32 0.0, %v557
    %v559 = vpop.f32.mrf.mxu0
    %560 = vmatprep.mubr.bf16.mxu0 0
    %561 = vmatmul.mubr.bf16.gmra.mxu0 %v429
    %v562 = vpop.f32.mrf.mxu0
    %v563 = vadd.f32 0.0, %v562
    %v564 = vpop.f32.mrf.mxu0
    %v565 = vpop.f32.mrf.mxu0
    %v566 = vadd.f32 0.0, %v565
    %v567 = vpop.f32.mrf.mxu0
    %568 = vmatprep.mubr.bf16.mxu0 0
    %569 = vmatmul.mubr.bf16.gmra.mxu0 %v430
    %v570 = vpop.f32.mrf.mxu0
    %v571 = vadd.f32 0.0, %v570
    %v572 = vpop.f32.mrf.mxu0
    %v573 = vpop.f32.mrf.mxu0
    %v574 = vadd.f32 0.0, %v573
    %v575 = vpop.f32.mrf.mxu0
    %576 = vmatprep.mubr.bf16.mxu0 0
    %577 = vmatmul.mubr.bf16.gmra.mxu0 %v431
    %v578 = vpop.f32.mrf.mxu0
    %v579 = vadd.f32 0.0, %v578
    %v580 = vpop.f32.mrf.mxu0
    %v581 = vpop.f32.mrf.mxu0
    %v582 = vadd.f32 0.0, %v581
    %v583 = vpop.f32.mrf.mxu0
    %584 = vdwg.mxu0
    %v601 = vunpack.c.l.b16 %v344
    %v602 = vunpack.c.l.b16 %v345
    %v603 = vunpack.c.l.b16 %v346
    %v604 = vunpack.c.l.b16 %v347
    %v605 = vunpack.c.l.b16 %v348
    %v606 = vunpack.c.l.b16 %v349
    %v607 = vunpack.c.l.b16 %v350
    %v608 = vunpack.c.l.b16 %v351
    %v609 = vunpack.c.l.b16 %v352
    %v610 = vunpack.c.l.b16 %v353
    %v611 = vunpack.c.l.b16 %v354
    %v612 = vunpack.c.l.b16 %v355
    %v613 = vunpack.c.l.b16 %v356
    %v614 = vunpack.c.l.b16 %v357
    %v615 = vunpack.c.l.b16 %v358
    %v616 = vunpack.c.l.b16 %v359
    %v617 = vpack.c.b16 %v602, %v601
    %v618 = vpack.c.b16 %v604, %v603
    %v619 = vpack.c.b16 %v606, %v605
    %v620 = vpack.c.b16 %v608, %v607
    %v621 = vpack.c.b16 %v610, %v609
    %v622 = vpack.c.b16 %v612, %v611
    %v623 = vpack.c.b16 %v614, %v613
    %v624 = vpack.c.b16 %v616, %v615
    %633 = vmatprep.subr.bf16.mxu0 0
    %634 = vmatpush1.bf16.msra.mxu0 %v624
    %635 = vmatprep.subr.bf16.mxu0 0
    %636 = vmatpush1.bf16.msra.mxu0 %v623
    %637 = vmatprep.subr.bf16.mxu0 0
    %638 = vmatpush1.bf16.msra.mxu0 %v622
    %639 = vmatprep.subr.bf16.mxu0 0
    %640 = vmatpush1.bf16.msra.mxu0 %v621
    %641 = vmatprep.subr.bf16.mxu0 0
    %642 = vmatpush1.bf16.msra.mxu0 %v620
    %643 = vmatprep.subr.bf16.mxu0 0
    %644 = vmatpush1.bf16.msra.mxu0 %v619
    %645 = vmatprep.subr.bf16.mxu0 0
    %646 = vmatpush1.bf16.msra.mxu0 %v618
    %647 = vmatprep.subr.bf16.mxu0 0
    %648 = vmatpush1.bf16.msra.mxu0 %v617
    %649 = vmatprep.subr.bf16.mxu0 0
    %650 = vmatpush2.bf16.msra.mxu0 0
    %651 = vmatprep.subr.bf16.mxu0 0
    %652 = vmatpush2.bf16.msra.mxu0 0
    %653 = vmatprep.subr.bf16.mxu0 0
    %654 = vmatpush2.bf16.msra.mxu0 0
    %655 = vmatprep.subr.bf16.mxu0 0
    %656 = vmatpush2.bf16.msra.mxu0 0
    %657 = vmatprep.subr.bf16.mxu0 0
    %658 = vmatpush2.bf16.msra.mxu0 0
    %659 = vmatprep.subr.bf16.mxu0 0
    %660 = vmatpush2.bf16.msra.mxu0 0
    %661 = vmatprep.subr.bf16.mxu0 0
    %662 = vmatpush2.bf16.msra.mxu0 0
    %663 = vmatprep.subr.bf16.mxu0 0
    %664 = vmatpush2.bf16.msra.mxu0 0
    %665 = vmatprep.mubr.bf16.mxu0 0
    %666 = vmatmul.mubr.bf16.gmra.mxu0 %v336
    %v667 = vpop.f32.mrf.mxu0
    %v668 = vadd.f32 %v523, %v667
    %v669 = vpop.f32.mrf.mxu0
    %v670 = vpop.f32.mrf.mxu0
    %v671 = vadd.f32 %v526, %v670
    %v672 = vpop.f32.mrf.mxu0
    %673 = vmatprep.mubr.bf16.mxu0 0
    %674 = vmatmul.mubr.bf16.gmra.mxu0 %v337
    %v675 = vpop.f32.mrf.mxu0
    %v676 = vadd.f32 %v531, %v675
    %v677 = vpop.f32.mrf.mxu0
    %v678 = vpop.f32.mrf.mxu0
    %v679 = vadd.f32 %v534, %v678
    %v680 = vpop.f32.mrf.mxu0
    %681 = vmatprep.mubr.bf16.mxu0 0
    %682 = vmatmul.mubr.bf16.gmra.mxu0 %v338
    %v683 = vpop.f32.mrf.mxu0
    %v684 = vadd.f32 %v539, %v683
    %v685 = vpop.f32.mrf.mxu0
    %v686 = vpop.f32.mrf.mxu0
    %v687 = vadd.f32 %v542, %v686
    %v688 = vpop.f32.mrf.mxu0
    %689 = vmatprep.mubr.bf16.mxu0 0
    %690 = vmatmul.mubr.bf16.gmra.mxu0 %v339
    %v691 = vpop.f32.mrf.mxu0
    %v692 = vadd.f32 %v547, %v691
    %v693 = vpop.f32.mrf.mxu0
    %v694 = vpop.f32.mrf.mxu0
    %v695 = vadd.f32 %v550, %v694
    %v696 = vpop.f32.mrf.mxu0
    %697 = vmatprep.mubr.bf16.mxu0 0
    %698 = vmatmul.mubr.bf16.gmra.mxu0 %v340
    %v699 = vpop.f32.mrf.mxu0
    %v700 = vadd.f32 %v555, %v699
    %v701 = vpop.f32.mrf.mxu0
    %v702 = vpop.f32.mrf.mxu0
    %v703 = vadd.f32 %v558, %v702
    %v704 = vpop.f32.mrf.mxu0
    %705 = vmatprep.mubr.bf16.mxu0 0
    %706 = vmatmul.mubr.bf16.gmra.mxu0 %v341
    %v707 = vpop.f32.mrf.mxu0
    %v708 = vadd.f32 %v563, %v707
    %v709 = vpop.f32.mrf.mxu0
    %v710 = vpop.f32.mrf.mxu0
    %v711 = vadd.f32 %v566, %v710
    %v712 = vpop.f32.mrf.mxu0
    %713 = vmatprep.mubr.bf16.mxu0 0
    %714 = vmatmul.mubr.bf16.gmra.mxu0 %v342
    %v715 = vpop.f32.mrf.mxu0
    %v716 = vadd.f32 %v571, %v715
    %v717 = vpop.f32.mrf.mxu0
    %v718 = vpop.f32.mrf.mxu0
    %v719 = vadd.f32 %v574, %v718
    %v720 = vpop.f32.mrf.mxu0
    %721 = vmatprep.mubr.bf16.mxu0 0
    %722 = vmatmul.mubr.bf16.gmra.mxu0 %v343
    %v723 = vpop.f32.mrf.mxu0
    %v724 = vadd.f32 %v579, %v723
    %v725 = vpop.f32.mrf.mxu0
    %v726 = vpop.f32.mrf.mxu0
    %v727 = vadd.f32 %v582, %v726
    %v728 = vpop.f32.mrf.mxu0
    %729 = vdwg.mxu0
    %v730 = vld [vmem:[%s5] sm:$0x1]
    %v732 = vlaneseq
    %v733 = vshrl.u32 %v732, 7
    %v734 = vsub.s32 0, %v733
    %v735 = vrot.slane %v730, %v734
    %v737 = vadd.f32 %v668, %v735
    %v738 = vadd.f32 %v671, %v735
    %v739 = vadd.f32 %v676, %v735
    %v740 = vadd.f32 %v679, %v735
    %v741 = vadd.f32 %v684, %v735
    %v742 = vadd.f32 %v687, %v735
    %v743 = vadd.f32 %v692, %v735
    %v744 = vadd.f32 %v695, %v735
    %v745 = vadd.f32 %v700, %v735
    %v746 = vadd.f32 %v703, %v735
    %v747 = vadd.f32 %v708, %v735
    %v748 = vadd.f32 %v711, %v735
    %v749 = vadd.f32 %v716, %v735
    %v750 = vadd.f32 %v719, %v735
    %v751 = vadd.f32 %v724, %v735
    %v752 = vadd.f32 %v727, %v735
    %vm753 = vcmp.ge.f32.partialorder %v737, 0.0
    %vm754 = vcmp.ge.f32.partialorder %v738, 0.0
    %vm755 = vcmp.ge.f32.partialorder %v739, 0.0
    %vm756 = vcmp.ge.f32.partialorder %v740, 0.0
    %vm757 = vcmp.ge.f32.partialorder %v741, 0.0
    %vm758 = vcmp.ge.f32.partialorder %v742, 0.0
    %vm759 = vcmp.ge.f32.partialorder %v743, 0.0
    %vm760 = vcmp.ge.f32.partialorder %v744, 0.0
    %vm761 = vcmp.ge.f32.partialorder %v745, 0.0
    %vm762 = vcmp.ge.f32.partialorder %v746, 0.0
    %vm763 = vcmp.ge.f32.partialorder %v747, 0.0
    %vm764 = vcmp.ge.f32.partialorder %v748, 0.0
    %vm765 = vcmp.ge.f32.partialorder %v749, 0.0
    %vm766 = vcmp.ge.f32.partialorder %v750, 0.0
    %vm767 = vcmp.ge.f32.partialorder %v751, 0.0
    %vm768 = vcmp.ge.f32.partialorder %v752, 0.0
    %v769 = vmul.f32 %v737, 0.01
    %v770 = vmul.f32 %v738, 0.01
    %v771 = vmul.f32 %v739, 0.01
    %v772 = vmul.f32 %v740, 0.01
    %v773 = vmul.f32 %v741, 0.01
    %v774 = vmul.f32 %v742, 0.01
    %v775 = vmul.f32 %v743, 0.01
    %v776 = vmul.f32 %v744, 0.01
    %v777 = vmul.f32 %v745, 0.01
    %v778 = vmul.f32 %v746, 0.01
    %v779 = vmul.f32 %v747, 0.01
    %v780 = vmul.f32 %v748, 0.01
    %v781 = vmul.f32 %v749, 0.01
    %v782 = vmul.f32 %v750, 0.01
    %v783 = vmul.f32 %v751, 0.01
    %v784 = vmul.f32 %v752, 0.01
    %v785 = vsel %vm753, %v737, %v769
    %v786 = vsel %vm754, %v738, %v770
    %v787 = vsel %vm755, %v739, %v771
    %v788 = vsel %vm756, %v740, %v772
    %v789 = vsel %vm757, %v741, %v773
    %v790 = vsel %vm758, %v742, %v774
    %v791 = vsel %vm759, %v743, %v775
    %v792 = vsel %vm760, %v744, %v776
    %v793 = vsel %vm761, %v745, %v777
    %v794 = vsel %vm762, %v746, %v778
    %v795 = vsel %vm763, %v747, %v779
    %v796 = vsel %vm764, %v748, %v780
    %v797 = vsel %vm765, %v749, %v781
    %v798 = vsel %vm766, %v750, %v782
    %v799 = vsel %vm767, %v751, %v783
    %v800 = vsel %vm768, %v752, %v784
    %801 = vst [vmem:[%s6] sm:$0xff] %v785
    %802 = vst [vmem:[%s6 + $0x8] sm:$0xff] %v786
    %803 = vst [vmem:[%s6 + $0x10] sm:$0xff] %v787
    %804 = vst [vmem:[%s6 + $0x18] sm:$0xff] %v788
    %805 = vst [vmem:[%s6 + $0x20] sm:$0xff] %v789
    %806 = vst [vmem:[%s6 + $0x28] sm:$0xff] %v790
    %807 = vst [vmem:[%s6 + $0x30] sm:$0xff] %v791
    %808 = vst [vmem:[%s6 + $0x38] sm:$0xff] %v792
    %809 = vst [vmem:[%s6 + $0x40] sm:$0xff] %v793
    %810 = vst [vmem:[%s6 + $0x48] sm:$0xff] %v794
    %811 = vst [vmem:[%s6 + $0x50] sm:$0xff] %v795
    %812 = vst [vmem:[%s6 + $0x58] sm:$0xff] %v796
    %813 = vst [vmem:[%s6 + $0x60] sm:$0xff] %v797
    %814 = vst [vmem:[%s6 + $0x68] sm:$0xff] %v798
    %815 = vst [vmem:[%s6 + $0x70] sm:$0xff] %v799
    %816 = vst [vmem:[%s6 + $0x78] sm:$0xff] %v800
  $region33: #{gnn_forward.2} parent=0 // pred_fallthru
    _
  // Predicated region
  $region34: #{gnn_forward.2} parent=0 // pred_check
    _
  $region35: #{gnn_forward.2} parent=0 // pred_check_branch
    %818 = sbr.rel (0) target = $region37
  $region36: #{gnn_forward.2} parent=0 // pred_region
    _
  $region37: #{gnn_forward.2} parent=0 // pred_fallthru
    _
  // Predicated region
  $region38: #{gnn_forward.2} parent=0 // pred_check
    _
  $region39: #{gnn_forward.2} parent=0 // pred_check_branch
    %820 = sbr.rel (0) target = $region41
  $region40: #{gnn_forward.2} parent=0 // pred_region
    _
  $region41: #{gnn_forward.2} parent=0 // pred_fallthru
    _

</llo_original>
